<compile_context>
chip_gen: v7x
topology: tpu7x:2x2x1
jax: 0.10.0
libtpu: 0.0.40
codegen_flags: <defaults>
</compile_context>

<pallas_src>
import functools
import math

import jax
import jax.numpy as jnp
from jax import lax
from jax.experimental import pallas as pl
from jax.experimental.pallas import tpu as pltpu


def _expand_norm_shuffle_kernel(x_ref, w_ref, s_ref, st_ref, g_ref, b_ref,
                                o_ref, *, inv_c, eps):
    # x_ref : (tm, C)        tm = R*W flattened pixels (R row-strips of W)
    # w_ref : (C, F)         expand weight (in x out), F = dim_scale*C
    # s_ref : (F, P)         chunk selector (P = dim_scale**2), f32
    # st_ref: (P, F)         its transpose, f32
    # g_ref, b_ref: (1, F)   LayerNorm gamma/beta tiled to full width, f32
    # o_ref : (R, dim_scale, W, dim_scale*c_out)  pixel-shuffled output
    r, ds, w_pix, half = o_ref.shape

    # Expansion matmul on the MXU; native operand dtype, f32 accumulation.
    y = jnp.dot(x_ref[...], w_ref[...], preferred_element_type=jnp.float32)

    # Per-chunk LayerNorm, fully vectorized: chunk sums + broadcast-back are
    # tiny MXU matmuls, so no sub-128-lane reductions and no masked partial
    # stores on the VPU/store path.
    s = s_ref[...]
    st = st_ref[...]
    mean = jnp.dot(jnp.dot(y, s, preferred_element_type=jnp.float32), st,
                   preferred_element_type=jnp.float32) * inv_c
    cen = y - mean
    var = jnp.dot(jnp.dot(cen * cen, s, preferred_element_type=jnp.float32),
                  st, preferred_element_type=jnp.float32) * inv_c
    out = (cen * lax.rsqrt(var + eps)) * g_ref[...] + b_ref[...]
    out = out.astype(o_ref.dtype)

    # Pixel shuffle fused into the store: output row p1 of each upsampled pair
    # takes the contiguous feature slab [p1*half, (p1+1)*half). The reshape
    # only regroups leading (sublane) dims; channels stay on lanes, so the
    # store is layout-preserving (no cross-lane relayout).
    for p1 in range(ds):
        o_ref[:, p1, :, :] = out[:, p1 * half:(p1 + 1) * half].reshape(
            r, w_pix, half)


def prepare_patch_expand_params(w_expand, gamma, beta, *, dim_scale=2):
    """One-time param prep (hoisted out of the per-call path): transpose the
    torch-convention (out,in) weight, tile gamma/beta to the expanded width,
    and build the chunk-selector matrices for the fused LayerNorm."""
    out_feat, C = w_expand.shape
    assert out_feat == dim_scale * C
    c_out = C // dim_scale
    p_sq = dim_scale * dim_scale
    wt = jnp.transpose(w_expand)                                  # (C, F)
    g_full = jnp.tile(gamma.astype(jnp.float32), p_sq).reshape(1, out_feat)
    b_full = jnp.tile(beta.astype(jnp.float32), p_sq).reshape(1, out_feat)
    grp = jnp.arange(out_feat) // c_out
    sel = (grp[:, None] == jnp.arange(p_sq)[None, :]).astype(jnp.float32)
    return wt, g_full, b_full, sel, jnp.transpose(sel)


def _vmem_limit_bytes():
    try:
        cap = pltpu.get_tpu_info().vmem_capacity_bytes
    except Exception:
        cap = 64 * 1024 * 1024            # conservative: v7x has 64 MiB / TC
    return int(min(48 * 1024 * 1024, (cap * 3) // 4))


def patch_expand_2d(x, wt, g_full, b_full, sel, sel_t, *, dim_scale=2,
                    eps=1e-5, block_pixels=2048):
    """x: (B, H, W, C) channels-last; wt: (C, dim_scale*C) pre-transposed."""
    B, H, W, C = x.shape
    out_feat = wt.shape[1]
    p_sq = dim_scale * dim_scale
    c_out = out_feat // p_sq
    half = dim_scale * c_out              # == C for the standard dim_scale=2
    BH = B * H
    N = BH * W

    # Row-strip tiling: each grid step handles R strips of W pixels so the
    # pixel shuffle can be written directly (no post-kernel transpose).
    r_align = 8 // math.gcd(W, 8)         # keep (R*W) % 8 == 0 when R < BH
    R = max(1, block_pixels // W)
    R = max(r_align, (R // r_align) * r_align)
    R = min(R, BH)

    # Keep double-buffered in/out tiles + resident weight + f32 temporaries
    # inside the VMEM budget (64 MiB on v7x, 128 MiB on v5e/v6e).
    vmem_limit = _vmem_limit_bytes()
    tile_budget = (vmem_limit * 3) // 4
    esz = x.dtype.itemsize
    wsz = wt.dtype.itemsize

    def _est(rows):
        tm_ = rows * W
        return (2 * tm_ * C * esz + 2 * tm_ * out_feat * esz
                + 2 * C * out_feat * wsz + 5 * tm_ * out_feat * 4)

    while R > r_align and _est(R) > tile_budget:
        R = max(r_align, ((R // 2) // r_align) * r_align)
    R = min(R, BH)
    tm = R * W

    x_flat = x.reshape(N, C)
    grid = (pl.cdiv(BH, R),)              # overhang strips are masked by Pallas

    kernel = functools.partial(_expand_norm_shuffle_kernel,
                               inv_c=1.0 / c_out, eps=eps)

    out4 = pl.pallas_call(
        kernel,
        out_shape=jax.ShapeDtypeStruct((BH, dim_scale, W, half), x.dtype),
        grid_spec=pltpu.PrefetchScalarGridSpec(
            num_scalar_prefetch=0,
            grid=grid,
            in_specs=[
                pl.BlockSpec((tm, C), lambda i: (i, 0)),           # pixel rows
                pl.BlockSpec((C, out_feat), lambda i: (0, 0)),     # weight
                pl.BlockSpec((out_feat, p_sq), lambda i: (0, 0)),  # selector
                pl.BlockSpec((p_sq, out_feat), lambda i: (0, 0)),  # selector^T
                pl.BlockSpec((1, out_feat), lambda i: (0, 0)),     # gamma
                pl.BlockSpec((1, out_feat), lambda i: (0, 0)),     # beta
            ],
            out_specs=pl.BlockSpec((R, dim_scale, W, half),
                                   lambda i: (i, 0, 0, 0)),
        ),
        compiler_params=pltpu.CompilerParams(
            dimension_semantics=("parallel",),
            vmem_limit_bytes=vmem_limit,
        ),
    )(x_flat, wt, sel, sel_t, g_full, b_full)

    # Pure reshape (contiguous dim splits/merges only):
    # (B*H, p1, W, p2*c) -> (B, H*p1, W*p2, c). No transpose, no extra HBM pass.
    return out4.reshape(B, H * dim_scale, W * dim_scale, c_out)


def _reference(x, w_expand, gamma, beta, dim_scale=2, eps=1e-5):
    B, H, W, C = x.shape
    c_out = C // dim_scale
    y = x @ w_expand.T
    y = y.reshape(B, H, W, dim_scale, dim_scale, c_out)
    y = y.transpose(0, 1, 3, 2, 4, 5).reshape(
        B, H * dim_scale, W * dim_scale, c_out)
    mean = y.mean(-1, keepdims=True)
    var = ((y - mean) ** 2).mean(-1, keepdims=True)
    return (y - mean) / jnp.sqrt(var + eps) * gamma + beta


if __name__ == "__main__":
    # Module config: PatchExpand2D(dim=16) -> input channels C = 32,
    # expand: Linear(32 -> 64, bias=False), norm: LayerNorm(16).
    dim = 16
    dim_scale = 2
    C = 2 * dim
    B, H, W = 2, 8, 8

    key = jax.random.PRNGKey(0)
    kx, kw, kg, kb = jax.random.split(key, 4)

    x = jax.random.normal(kx, (B, H, W, C), dtype=jnp.float32)
    # nn.Linear weight: (out_features, in_features) = (dim_scale*C, C)
    w_expand = 0.05 * jax.random.normal(kw, (dim_scale * C, C), dtype=jnp.float32)
    gamma = 1.0 + 0.1 * jax.random.normal(kg, (C // dim_scale,), dtype=jnp.float32)
    beta = 0.1 * jax.random.normal(kb, (C // dim_scale,), dtype=jnp.float32)

    params = prepare_patch_expand_params(w_expand, gamma, beta,
                                         dim_scale=dim_scale)
    out = patch_expand_2d(x, *params, dim_scale=dim_scale)
    out = jax.block_until_ready(out)

    ref = _reference(x, w_expand, gamma, beta, dim_scale=dim_scale)
    assert out.shape == (B, H * dim_scale, W * dim_scale, C // dim_scale)
    err = float(jnp.max(jnp.abs(out - ref)))
    assert jnp.allclose(out, ref, atol=2e-4, rtol=2e-4), err
    print("KERNEL_OK")
</pallas_src>

<mosaic_0001>
module attributes {stable_mosaic.version = 11 : i64} {
  func.func @_expand_norm_shuffle_kernel(%arg0: i32, %arg1: memref<128x32xf32, #tpu.memory_space<vmem>>, %arg2: memref<32x64xf32, #tpu.memory_space<vmem>>, %arg3: memref<64x4xf32, #tpu.memory_space<vmem>>, %arg4: memref<4x64xf32, #tpu.memory_space<vmem>>, %arg5: memref<1x64xf32, #tpu.memory_space<vmem>>, %arg6: memref<1x64xf32, #tpu.memory_space<vmem>>, %arg7: memref<16x2x8x32xf32, #tpu.memory_space<vmem>>) attributes {dimension_semantics = [#tpu.dimension_semantics<parallel>], iteration_bounds = array<i64: 1>, scalar_prefetch = 0 : i64, scratch_operands = 0 : i64, tpu.core_type = #tpu.core_type<tc>, window_params = [{transform_indices = @transform_0, window_bounds = array<i64: 128, 32>}, {pipeline_mode = #tpu.pipeline_mode<synchronous>, transform_indices = @transform_1, window_bounds = array<i64: 32, 64>}, {pipeline_mode = #tpu.pipeline_mode<synchronous>, transform_indices = @transform_2, window_bounds = array<i64: 64, 4>}, {pipeline_mode = #tpu.pipeline_mode<synchronous>, transform_indices = @transform_3, window_bounds = array<i64: 4, 64>}, {pipeline_mode = #tpu.pipeline_mode<synchronous>, transform_indices = @transform_4, window_bounds = array<i64: 1, 64>}, {pipeline_mode = #tpu.pipeline_mode<synchronous>, transform_indices = @transform_5, window_bounds = array<i64: 1, 64>}, {transform_indices = @transform_6, window_bounds = array<i64: 16, 2, 8, 32>}]} {
    %c0 = arith.constant 0 : index
    %c0_0 = arith.constant 0 : index
    %0 = vector.load %arg1[%c0, %c0_0] : memref<128x32xf32, #tpu.memory_space<vmem>>, vector<128x32xf32>
    %c0_1 = arith.constant 0 : index
    %c0_2 = arith.constant 0 : index
    %1 = vector.load %arg2[%c0_1, %c0_2] : memref<32x64xf32, #tpu.memory_space<vmem>>, vector<32x64xf32>
    %cst = arith.constant dense<0.000000e+00> : vector<128x64xf32>
    %2 = tpu.matmul %0, %1, %cst {dimension_numbers = #tpu.dot_dimension_numbers<[1], [0], [0], [1], [0, 0, 1, 1], [], []>} : vector<128x32xf32>, vector<32x64xf32>, vector<128x64xf32> -> vector<128x64xf32>
    %c0_3 = arith.constant 0 : index
    %c0_4 = arith.constant 0 : index
    %3 = vector.load %arg3[%c0_3, %c0_4] : memref<64x4xf32, #tpu.memory_space<vmem>>, vector<64x4xf32>
    %c0_5 = arith.constant 0 : index
    %c0_6 = arith.constant 0 : index
    %4 = vector.load %arg4[%c0_5, %c0_6] : memref<4x64xf32, #tpu.memory_space<vmem>>, vector<4x64xf32>
    %cst_7 = arith.constant dense<0.000000e+00> : vector<128x4xf32>
    %5 = tpu.matmul %2, %3, %cst_7 {dimension_numbers = #tpu.dot_dimension_numbers<[1], [0], [0], [1], [0, 0, 1, 1], [], []>} : vector<128x64xf32>, vector<64x4xf32>, vector<128x4xf32> -> vector<128x4xf32>
    %cst_8 = arith.constant dense<0.000000e+00> : vector<128x64xf32>
    %6 = tpu.matmul %5, %4, %cst_8 {dimension_numbers = #tpu.dot_dimension_numbers<[1], [0], [0], [1], [0, 0, 1, 1], [], []>} : vector<128x4xf32>, vector<4x64xf32>, vector<128x64xf32> -> vector<128x64xf32>
    %cst_9 = arith.constant 6.250000e-02 : f32
    %7 = vector.broadcast %cst_9 : f32 to vector<128x64xf32>
    %8 = arith.mulf %6, %7 : vector<128x64xf32>
    %9 = arith.subf %2, %8 : vector<128x64xf32>
    %10 = arith.mulf %9, %9 : vector<128x64xf32>
    %cst_10 = arith.constant dense<0.000000e+00> : vector<128x4xf32>
    %11 = tpu.matmul %10, %3, %cst_10 {dimension_numbers = #tpu.dot_dimension_numbers<[1], [0], [0], [1], [0, 0, 1, 1], [], []>} : vector<128x64xf32>, vector<64x4xf32>, vector<128x4xf32> -> vector<128x4xf32>
    %cst_11 = arith.constant dense<0.000000e+00> : vector<128x64xf32>
    %12 = tpu.matmul %11, %4, %cst_11 {dimension_numbers = #tpu.dot_dimension_numbers<[1], [0], [0], [1], [0, 0, 1, 1], [], []>} : vector<128x4xf32>, vector<4x64xf32>, vector<128x64xf32> -> vector<128x64xf32>
    %cst_12 = arith.constant 6.250000e-02 : f32
    %13 = vector.broadcast %cst_12 : f32 to vector<128x64xf32>
    %14 = arith.mulf %12, %13 : vector<128x64xf32>
    %cst_13 = arith.constant 9.99999974E-6 : f32
    %15 = vector.broadcast %cst_13 : f32 to vector<128x64xf32>
    %16 = arith.addf %14, %15 : vector<128x64xf32>
    %17 = math.rsqrt %16 : vector<128x64xf32>
    %18 = arith.mulf %9, %17 : vector<128x64xf32>
    %c0_14 = arith.constant 0 : index
    %c0_15 = arith.constant 0 : index
    %19 = vector.load %arg5[%c0_14, %c0_15] : memref<1x64xf32, #tpu.memory_space<vmem>>, vector<1x64xf32>
    %20 = vector.broadcast %19 : vector<1x64xf32> to vector<128x64xf32>
    %21 = arith.mulf %18, %20 : vector<128x64xf32>
    %c0_16 = arith.constant 0 : index
    %c0_17 = arith.constant 0 : index
    %22 = vector.load %arg6[%c0_16, %c0_17] : memref<1x64xf32, #tpu.memory_space<vmem>>, vector<1x64xf32>
    %23 = vector.broadcast %22 : vector<1x64xf32> to vector<128x64xf32>
    %24 = arith.addf %21, %23 : vector<128x64xf32>
    %25 = vector.extract_strided_slice %24 {offsets = [0, 0], sizes = [128, 32], strides = [1, 1]} : vector<128x64xf32> to vector<128x32xf32>
    %26 = vector.shape_cast %25 : vector<128x32xf32> to vector<16x8x32xf32>
    %c0_18 = arith.constant 0 : index
    %c0_19 = arith.constant 0 : index
    %c0_20 = arith.constant 0 : index
    %c0_21 = arith.constant 0 : index
    %27 = vector.load %arg7[%c0_18, %c0_19, %c0_20, %c0_21] : memref<16x2x8x32xf32, #tpu.memory_space<vmem>>, vector<16x1x8x32xf32>
    %28 = vector.shape_cast %27 : vector<16x1x8x32xf32> to vector<16x8x32xf32>
    %29 = vector.shape_cast %26 : vector<16x8x32xf32> to vector<16x1x8x32xf32>
    tpu.vector_store %arg7[%c0_18, %c0_19, %c0_20, %c0_21], %29 {strides = array<i32>} : memref<16x2x8x32xf32, #tpu.memory_space<vmem>>, vector<16x1x8x32xf32>,
    %30 = vector.extract_strided_slice %24 {offsets = [0, 32], sizes = [128, 32], strides = [1, 1]} : vector<128x64xf32> to vector<128x32xf32>
    %31 = vector.shape_cast %30 : vector<128x32xf32> to vector<16x8x32xf32>
    %c0_22 = arith.constant 0 : index
    %c1 = arith.constant 1 : index
    %c0_23 = arith.constant 0 : index
    %c0_24 = arith.constant 0 : index
    %32 = vector.load %arg7[%c0_22, %c1, %c0_23, %c0_24] : memref<16x2x8x32xf32, #tpu.memory_space<vmem>>, vector<16x1x8x32xf32>
    %33 = vector.shape_cast %32 : vector<16x1x8x32xf32> to vector<16x8x32xf32>
    %34 = vector.shape_cast %31 : vector<16x8x32xf32> to vector<16x1x8x32xf32>
    tpu.vector_store %arg7[%c0_22, %c1, %c0_23, %c0_24], %34 {strides = array<i32>} : memref<16x2x8x32xf32, #tpu.memory_space<vmem>>, vector<16x1x8x32xf32>,
    return
  }
  func.func @transform_0(%arg0: i32) -> (i32, i32) {
    %c0_i32 = arith.constant 0 : i32
    %c0_i32_0 = arith.constant 0 : i32
    return %arg0, %c0_i32 : i32, i32
  }
  func.func @transform_1(%arg0: i32) -> (i32, i32) {
    %c0_i32 = arith.constant 0 : i32
    %c0_i32_0 = arith.constant 0 : i32
    %c0_i32_1 = arith.constant 0 : i32
    return %c0_i32, %c0_i32_0 : i32, i32
  }
  func.func @transform_2(%arg0: i32) -> (i32, i32) {
    %c0_i32 = arith.constant 0 : i32
    %c0_i32_0 = arith.constant 0 : i32
    %c0_i32_1 = arith.constant 0 : i32
    return %c0_i32, %c0_i32_0 : i32, i32
  }
  func.func @transform_3(%arg0: i32) -> (i32, i32) {
    %c0_i32 = arith.constant 0 : i32
    %c0_i32_0 = arith.constant 0 : i32
    %c0_i32_1 = arith.constant 0 : i32
    return %c0_i32, %c0_i32_0 : i32, i32
  }
  func.func @transform_4(%arg0: i32) -> (i32, i32) {
    %c0_i32 = arith.constant 0 : i32
    %c0_i32_0 = arith.constant 0 : i32
    %c0_i32_1 = arith.constant 0 : i32
    return %c0_i32, %c0_i32_0 : i32, i32
  }
  func.func @transform_5(%arg0: i32) -> (i32, i32) {
    %c0_i32 = arith.constant 0 : i32
    %c0_i32_0 = arith.constant 0 : i32
    %c0_i32_1 = arith.constant 0 : i32
    return %c0_i32, %c0_i32_0 : i32, i32
  }
  func.func @transform_6(%arg0: i32) -> (i32, i32, i32, i32) {
    %c0_i32 = arith.constant 0 : i32
    %c0_i32_0 = arith.constant 0 : i32
    %c0_i32_1 = arith.constant 0 : i32
    %c0_i32_2 = arith.constant 0 : i32
    return %arg0, %c0_i32, %c0_i32_0, %c0_i32_1 : i32, i32, i32, i32
  }
}

</mosaic_0001>

<llo_original>
// kernel: tpu_custom_call.1
$region0: #{tpu_custom_call.1}
  #allocation0 [shape = 'u32[]', space=smem, size = 0x4, offset = 0x4, fixed_abs, tag = 'smem constant byte address 0x4 - core index']
  #allocation1 [shape = 'u32[144,128]{1,0:T(1,128)}', space=vmem, size = 0x12000, scoped, tag = 'internal scratch']
  %s0 = inlined_call_operand.vmem [shape: f32[128,32], index: 0, kind: input, shape index: {}]
  %s1 = inlined_call_operand.vmem [shape: f32[32,64], index: 1, kind: input, shape index: {}]
  %s2 = inlined_call_operand.vmem [shape: f32[64,4], index: 2, kind: input, shape index: {}]
  %s3 = inlined_call_operand.vmem [shape: f32[4,64], index: 3, kind: input, shape index: {}]
  %s4 = inlined_call_operand.vmem [shape: f32[1,64], index: 4, kind: input, shape index: {}]
  %s5 = inlined_call_operand.vmem [shape: f32[1,64], index: 5, kind: input, shape index: {}]
  %s6 = inlined_call_operand.hbm [shape: f32[16,2,8,32], index: 6, kind: output, shape index: {}]
  %s7 = sld [smem:[#allocation0]]
  $region34: #{tpu_custom_call.1} parent=0
    _
  %s9 = ssub.s32 1, %s7
  %s10 = scalar_select 0, %s9, %s7
  $region1: #{tpu_custom_call.1} parent=0
    #allocation2 [shape = 'u8[131072]{0}', space=vmem, size = 0x20000, scoped, tag = 'output window, operand 0, single buffered']
    #allocation3 [shape = 's32[1]{0}', space=sflag, size = 0x4, scoped, tag = 'scoped memory for tpu_custom_call.1']
    %11 = vsyncpa [#allocation3], 0
    // Predicated region
    $region2: #{tpu_custom_call.1} parent=1 // pred_check
      _
    $region3: #{tpu_custom_call.1} parent=1 // pred_check_branch
      %13 = sbr.rel (0) target = $region5
    $region4: #{tpu_custom_call.1} parent=1 // pred_region
      _
    $region5: #{tpu_custom_call.1} parent=1 // pred_fallthru
      _
    // Predicated region
    $region6: #{tpu_custom_call.1} parent=1 // pred_check
      _
    $region7: #{tpu_custom_call.1} parent=1 // pred_check_branch
      %15 = sbr.rel (0) target = $region9
    $region8: #{tpu_custom_call.1} parent=1 // pred_region
      _
    $region9: #{tpu_custom_call.1} parent=1 // pred_fallthru
      _
    // Predicated region
    $region10: #{tpu_custom_call.1} parent=1 // pred_check
      _
    $region11: #{tpu_custom_call.1} parent=1 // pred_check_branch
      %17 = sbr.rel (0) target = $region13
    $region12: #{tpu_custom_call.1} parent=1 // pred_region
      _
    $region13: #{tpu_custom_call.1} parent=1 // pred_fallthru
      _
    // Predicated region
    $region14: #{tpu_custom_call.1} parent=1 // pred_check
      _
    $region15: #{tpu_custom_call.1} parent=1 // pred_check_branch
      %19 = sbr.rel (0) target = $region17
    $region16: #{tpu_custom_call.1} parent=1 // pred_region
      _
    $region17: #{tpu_custom_call.1} parent=1 // pred_fallthru
      _
    // Predicated region
    $region18: #{tpu_custom_call.1} parent=1 // pred_check
      _
    $region19: #{tpu_custom_call.1} parent=1 // pred_check_branch
      %21 = sbr.rel (0) target = $region21
    $region20: #{tpu_custom_call.1} parent=1 // pred_region
      _
    $region21: #{tpu_custom_call.1} parent=1 // pred_fallthru
      _
    // Predicated region
    $region22: #{tpu_custom_call.1} parent=1 // pred_check
      _
    $region23: #{tpu_custom_call.1} parent=1 // pred_check_branch
      %23 = sbr.rel (0) target = $region25
    $region24: #{tpu_custom_call.1} parent=1 // pred_region
      _
    $region25: #{tpu_custom_call.1} parent=1 // pred_fallthru
      _
    %v24 = vld [vmem:[%s0] sm:$0xff]
    %v25 = vld [vmem:[%s0 + $0x8] sm:$0xff]
    %v26 = vld [vmem:[%s0 + $0x10] sm:$0xff]
    %v27 = vld [vmem:[%s0 + $0x18] sm:$0xff]
    %v28 = vld [vmem:[%s0 + $0x20] sm:$0xff]
    %v29 = vld [vmem:[%s0 + $0x28] sm:$0xff]
    %v30 = vld [vmem:[%s0 + $0x30] sm:$0xff]
    %v31 = vld [vmem:[%s0 + $0x38] sm:$0xff]
    %v32 = vld [vmem:[%s0 + $0x40] sm:$0xff]
    %v33 = vld [vmem:[%s0 + $0x48] sm:$0xff]
    %v34 = vld [vmem:[%s0 + $0x50] sm:$0xff]
    %v35 = vld [vmem:[%s0 + $0x58] sm:$0xff]
    %v36 = vld [vmem:[%s0 + $0x60] sm:$0xff]
    %v37 = vld [vmem:[%s0 + $0x68] sm:$0xff]
    %v38 = vld [vmem:[%s0 + $0x70] sm:$0xff]
    %v39 = vld [vmem:[%s0 + $0x78] sm:$0xff]
    %v40 = vld [vmem:[%s1] sm:$0xff]
    %v41 = vld [vmem:[%s1 + $0x8] sm:$0xff]
    %v42 = vld [vmem:[%s1 + $0x10] sm:$0xff]
    %v43 = vld [vmem:[%s1 + $0x18] sm:$0xff]
    %vm44 = vcmask 261120
    %v46 = vsel %vm44, %v24, 0
    %v49 = vsel %vm44, %v25, 0
    %v52 = vsel %vm44, %v26, 0
    %v55 = vsel %vm44, %v27, 0
    %v58 = vsel %vm44, %v28, 0
    %v61 = vsel %vm44, %v29, 0
    %v64 = vsel %vm44, %v30, 0
    %v67 = vsel %vm44, %v31, 0
    %v70 = vsel %vm44, %v32, 0
    %v73 = vsel %vm44, %v33, 0
    %v76 = vsel %vm44, %v34, 0
    %v79 = vsel %vm44, %v35, 0
    %v82 = vsel %vm44, %v36, 0
    %v85 = vsel %vm44, %v37, 0
    %v88 = vsel %vm44, %v38, 0
    %v91 = vsel %vm44, %v39, 0
    %93 = vmatprep.subr.mxu0 0.0
    %94 = vmatpush1.msra.mxu0 %v40
    %95 = vmatprep.subr.mxu0 0.0
    %96 = vmatpush1.msra.mxu0 %v41
    %97 = vmatprep.subr.mxu0 0.0
    %98 = vmatpush1.msra.mxu0 %v42
    %99 = vmatprep.subr.mxu0 0.0
    %100 = vmatpush1.msra.mxu0 %v43
    %101 = vmatprep.subr.mxu0 0.0
    %102 = vmatpush1.msra.mxu0 0.0
    %103 = vmatprep.subr.mxu0 0.0
    %104 = vmatpush1.msra.mxu0 0.0
    %105 = vmatprep.subr.mxu0 0.0
    %106 = vmatpush1.msra.mxu0 0.0
    %107 = vmatprep.subr.mxu0 0.0
    %108 = vmatpush1.msra.mxu0 0.0
    %109 = vmatprep.subr.mxu0 0.0
    %110 = vmatpush1.msra.mxu0 0.0
    %111 = vmatprep.subr.mxu0 0.0
    %112 = vmatpush1.msra.mxu0 0.0
    %113 = vmatprep.subr.mxu0 0.0
    %114 = vmatpush1.msra.mxu0 0.0
    %115 = vmatprep.subr.mxu0 0.0
    %116 = vmatpush1.msra.mxu0 0.0
    %117 = vmatprep.subr.mxu0 0.0
    %118 = vmatpush1.msra.mxu0 0.0
    %119 = vmatprep.subr.mxu0 0.0
    %120 = vmatpush1.msra.mxu0 0.0
    %121 = vmatprep.subr.mxu0 0.0
    %122 = vmatpush1.msra.mxu0 0.0
    %123 = vmatprep.subr.mxu0 0.0
    %124 = vmatpush1.msra.mxu0 0.0
    %125 = vmatprep.subr.mxu0 0.0
    %126 = vmatpush1.msra.mxu0 0.0
    %127 = vmatprep.subr.mxu0 0.0
    %128 = vmatpush1.msra.mxu0 0.0
    %129 = vmatprep.subr.mxu0 0.0
    %130 = vmatpush1.msra.mxu0 0.0
    %131 = vmatprep.subr.mxu0 0.0
    %132 = vmatpush1.msra.mxu0 0.0
    %133 = vmatprep.subr.mxu0 0.0
    %134 = vmatpush1.msra.mxu0 0.0
    %135 = vmatprep.subr.mxu0 0.0
    %136 = vmatpush1.msra.mxu0 0.0
    %137 = vmatprep.subr.mxu0 0.0
    %138 = vmatpush1.msra.mxu0 0.0
    %139 = vmatprep.subr.mxu0 0.0
    %140 = vmatpush1.msra.mxu0 0.0
    %141 = vmatprep.subr.mxu0 0.0
    %142 = vmatpush1.msra.mxu0 0.0
    %143 = vmatprep.subr.mxu0 0.0
    %144 = vmatpush1.msra.mxu0 0.0
    %145 = vmatprep.subr.mxu0 0.0
    %146 = vmatpush1.msra.mxu0 0.0
    %147 = vmatprep.subr.mxu0 0.0
    %148 = vmatpush1.msra.mxu0 0.0
    %149 = vmatprep.subr.mxu0 0.0
    %150 = vmatpush1.msra.mxu0 0.0
    %151 = vmatprep.subr.mxu0 0.0
    %152 = vmatpush1.msra.mxu0 0.0
    %153 = vmatprep.subr.mxu0 0.0
    %154 = vmatpush1.msra.mxu0 0.0
    %155 = vmatprep.subr.mxu0 0.0
    %156 = vmatpush1.msra.mxu0 0.0
    %157 = vmatprep.mubr.f32.mxu0 0.0
    %158 = vmatmul.mubr.f32.gmra.mrb[0].mxu0 %v46
    %v159 = vpop.f32.mrb[0].mxu0
    %v160 = vadd.f32 0.0, %v159
    %v161 = vpop.f32.mrb[0].mxu0
    %162 = vmatprep.mubr.f32.mxu0 0.0
    %163 = vmatmul.mubr.f32.gmra.mrb[0].mxu0 %v49
    %v164 = vpop.f32.mrb[0].mxu0
    %v165 = vadd.f32 0.0, %v164
    %v166 = vpop.f32.mrb[0].mxu0
    %167 = vmatprep.mubr.f32.mxu0 0.0
    %168 = vmatmul.mubr.f32.gmra.mrb[0].mxu0 %v52
    %v169 = vpop.f32.mrb[0].mxu0
    %v170 = vadd.f32 0.0, %v169
    %v171 = vpop.f32.mrb[0].mxu0
    %172 = vmatprep.mubr.f32.mxu0 0.0
    %173 = vmatmul.mubr.f32.gmra.mrb[0].mxu0 %v55
    %v174 = vpop.f32.mrb[0].mxu0
    %v175 = vadd.f32 0.0, %v174
    %v176 = vpop.f32.mrb[0].mxu0
    %177 = vmatprep.mubr.f32.mxu0 0.0
    %178 = vmatmul.mubr.f32.gmra.mrb[0].mxu0 %v58
    %v179 = vpop.f32.mrb[0].mxu0
    %v180 = vadd.f32 0.0, %v179
    %v181 = vpop.f32.mrb[0].mxu0
    %182 = vmatprep.mubr.f32.mxu0 0.0
    %183 = vmatmul.mubr.f32.gmra.mrb[0].mxu0 %v61
    %v184 = vpop.f32.mrb[0].mxu0
    %v185 = vadd.f32 0.0, %v184
    %v186 = vpop.f32.mrb[0].mxu0
    %187 = vmatprep.mubr.f32.mxu0 0.0
    %188 = vmatmul.mubr.f32.gmra.mrb[0].mxu0 %v64
    %v189 = vpop.f32.mrb[0].mxu0
    %v190 = vadd.f32 0.0, %v189
    %v191 = vpop.f32.mrb[0].mxu0
    %192 = vmatprep.mubr.f32.mxu0 0.0
    %193 = vmatmul.mubr.f32.gmra.mrb[0].mxu0 %v67
    %v194 = vpop.f32.mrb[0].mxu0
    %v195 = vadd.f32 0.0, %v194
    %v196 = vpop.f32.mrb[0].mxu0
    %197 = vmatprep.mubr.f32.mxu0 0.0
    %198 = vmatmul.mubr.f32.gmra.mrb[0].mxu0 %v70
    %v199 = vpop.f32.mrb[0].mxu0
    %v200 = vadd.f32 0.0, %v199
    %v201 = vpop.f32.mrb[0].mxu0
    %202 = vmatprep.mubr.f32.mxu0 0.0
    %203 = vmatmul.mubr.f32.gmra.mrb[0].mxu0 %v73
    %v204 = vpop.f32.mrb[0].mxu0
    %v205 = vadd.f32 0.0, %v204
    %v206 = vpop.f32.mrb[0].mxu0
    %207 = vmatprep.mubr.f32.mxu0 0.0
    %208 = vmatmul.mubr.f32.gmra.mrb[0].mxu0 %v76
    %v209 = vpop.f32.mrb[0].mxu0
    %v210 = vadd.f32 0.0, %v209
    %v211 = vpop.f32.mrb[0].mxu0
    %212 = vmatprep.mubr.f32.mxu0 0.0
    %213 = vmatmul.mubr.f32.gmra.mrb[0].mxu0 %v79
    %v214 = vpop.f32.mrb[0].mxu0
    %v215 = vadd.f32 0.0, %v214
    %v216 = vpop.f32.mrb[0].mxu0
    %217 = vmatprep.mubr.f32.mxu0 0.0
    %218 = vmatmul.mubr.f32.gmra.mrb[0].mxu0 %v82
    %v219 = vpop.f32.mrb[0].mxu0
    %v220 = vadd.f32 0.0, %v219
    %v221 = vpop.f32.mrb[0].mxu0
    %222 = vmatprep.mubr.f32.mxu0 0.0
    %223 = vmatmul.mubr.f32.gmra.mrb[0].mxu0 %v85
    %v224 = vpop.f32.mrb[0].mxu0
    %v225 = vadd.f32 0.0, %v224
    %v226 = vpop.f32.mrb[0].mxu0
    %227 = vmatprep.mubr.f32.mxu0 0.0
    %228 = vmatmul.mubr.f32.gmra.mrb[0].mxu0 %v88
    %v229 = vpop.f32.mrb[0].mxu0
    %v230 = vadd.f32 0.0, %v229
    %v231 = vpop.f32.mrb[0].mxu0
    %232 = vmatprep.mubr.f32.mxu0 0.0
    %233 = vmatmul.mubr.f32.gmra.mrb[0].mxu0 %v91
    %v234 = vpop.f32.mrb[0].mxu0
    %v235 = vadd.f32 0.0, %v234
    %v236 = vpop.f32.mrb[0].mxu0
    %237 = vdwg.mxu0
    %v238 = vld [vmem:[%s2] sm:$0xff]
    %v239 = vld [vmem:[%s2 + $0x8] sm:$0xff]
    %v240 = vld [vmem:[%s2 + $0x10] sm:$0xff]
    %v241 = vld [vmem:[%s2 + $0x18] sm:$0xff]
    %v242 = vld [vmem:[%s2 + $0x20] sm:$0xff]
    %v243 = vld [vmem:[%s2 + $0x28] sm:$0xff]
    %v244 = vld [vmem:[%s2 + $0x30] sm:$0xff]
    %v245 = vld [vmem:[%s2 + $0x38] sm:$0xff]
    %v246 = vld [vmem:[%s3] sm:$0xf]
    %vm247 = vcmask 523264
    %v249 = vsel %vm247, %v160, 0
    %v252 = vsel %vm247, %v165, 0
    %v255 = vsel %vm247, %v170, 0
    %v258 = vsel %vm247, %v175, 0
    %v261 = vsel %vm247, %v180, 0
    %v264 = vsel %vm247, %v185, 0
    %v267 = vsel %vm247, %v190, 0
    %v270 = vsel %vm247, %v195, 0
    %v273 = vsel %vm247, %v200, 0
    %v276 = vsel %vm247, %v205, 0
    %v279 = vsel %vm247, %v210, 0
    %v282 = vsel %vm247, %v215, 0
    %v285 = vsel %vm247, %v220, 0
    %v288 = vsel %vm247, %v225, 0
    %v291 = vsel %vm247, %v230, 0
    %v294 = vsel %vm247, %v235, 0
    %296 = vmatprep.subr.mxu0 0.0
    %297 = vmatpush1.msra.mxu0 %v238
    %298 = vmatprep.subr.mxu0 0.0
    %299 = vmatpush1.msra.mxu0 %v239
    %300 = vmatprep.subr.mxu0 0.0
    %301 = vmatpush1.msra.mxu0 %v240
    %302 = vmatprep.subr.mxu0 0.0
    %303 = vmatpush1.msra.mxu0 %v241
    %304 = vmatprep.subr.mxu0 0.0
    %305 = vmatpush1.msra.mxu0 %v242
    %306 = vmatprep.subr.mxu0 0.0
    %307 = vmatpush1.msra.mxu0 %v243
    %308 = vmatprep.subr.mxu0 0.0
    %309 = vmatpush1.msra.mxu0 %v244
    %310 = vmatprep.subr.mxu0 0.0
    %311 = vmatpush1.msra.mxu0 %v245
    %312 = vmatprep.subr.mxu0 0.0
    %313 = vmatpush1.msra.mxu0 0.0
    %314 = vmatprep.subr.mxu0 0.0
    %315 = vmatpush1.msra.mxu0 0.0
    %316 = vmatprep.subr.mxu0 0.0
    %317 = vmatpush1.msra.mxu0 0.0
    %318 = vmatprep.subr.mxu0 0.0
    %319 = vmatpush1.msra.mxu0 0.0
    %320 = vmatprep.subr.mxu0 0.0
    %321 = vmatpush1.msra.mxu0 0.0
    %322 = vmatprep.subr.mxu0 0.0
    %323 = vmatpush1.msra.mxu0 0.0
    %324 = vmatprep.subr.mxu0 0.0
    %325 = vmatpush1.msra.mxu0 0.0
    %326 = vmatprep.subr.mxu0 0.0
    %327 = vmatpush1.msra.mxu0 0.0
    %328 = vmatprep.subr.mxu0 0.0
    %329 = vmatpush1.msra.mxu0 0.0
    %330 = vmatprep.subr.mxu0 0.0
    %331 = vmatpush1.msra.mxu0 0.0
    %332 = vmatprep.subr.mxu0 0.0
    %333 = vmatpush1.msra.mxu0 0.0
    %334 = vmatprep.subr.mxu0 0.0
    %335 = vmatpush1.msra.mxu0 0.0
    %336 = vmatprep.subr.mxu0 0.0
    %337 = vmatpush1.msra.mxu0 0.0
    %338 = vmatprep.subr.mxu0 0.0
    %339 = vmatpush1.msra.mxu0 0.0
    %340 = vmatprep.subr.mxu0 0.0
    %341 = vmatpush1.msra.mxu0 0.0
    %342 = vmatprep.subr.mxu0 0.0
    %343 = vmatpush1.msra.mxu0 0.0
    %344 = vmatprep.subr.mxu0 0.0
    %345 = vmatpush1.msra.mxu0 0.0
    %346 = vmatprep.subr.mxu0 0.0
    %347 = vmatpush1.msra.mxu0 0.0
    %348 = vmatprep.subr.mxu0 0.0
    %349 = vmatpush1.msra.mxu0 0.0
    %350 = vmatprep.subr.mxu0 0.0
    %351 = vmatpush1.msra.mxu0 0.0
    %352 = vmatprep.subr.mxu0 0.0
    %353 = vmatpush1.msra.mxu0 0.0
    %354 = vmatprep.subr.mxu0 0.0
    %355 = vmatpush1.msra.mxu0 0.0
    %356 = vmatprep.subr.mxu0 0.0
    %357 = vmatpush1.msra.mxu0 0.0
    %358 = vmatprep.subr.mxu0 0.0
    %359 = vmatpush1.msra.mxu0 0.0
    %360 = vmatprep.mubr.f32.mxu0 0.0
    %361 = vmatmul.mubr.f32.gmra.mrb[0].mxu0 %v249
    %v362 = vpop.f32.mrb[0].mxu0
    %v363 = vadd.f32 0.0, %v362
    %v364 = vpop.f32.mrb[0].mxu0
    %365 = vmatprep.mubr.f32.mxu0 0.0
    %366 = vmatmul.mubr.f32.gmra.mrb[0].mxu0 %v252
    %v367 = vpop.f32.mrb[0].mxu0
    %v368 = vadd.f32 0.0, %v367
    %v369 = vpop.f32.mrb[0].mxu0
    %370 = vmatprep.mubr.f32.mxu0 0.0
    %371 = vmatmul.mubr.f32.gmra.mrb[0].mxu0 %v255
    %v372 = vpop.f32.mrb[0].mxu0
    %v373 = vadd.f32 0.0, %v372
    %v374 = vpop.f32.mrb[0].mxu0
    %375 = vmatprep.mubr.f32.mxu0 0.0
    %376 = vmatmul.mubr.f32.gmra.mrb[0].mxu0 %v258
    %v377 = vpop.f32.mrb[0].mxu0
    %v378 = vadd.f32 0.0, %v377
    %v379 = vpop.f32.mrb[0].mxu0
    %380 = vmatprep.mubr.f32.mxu0 0.0
    %381 = vmatmul.mubr.f32.gmra.mrb[0].mxu0 %v261
    %v382 = vpop.f32.mrb[0].mxu0
    %v383 = vadd.f32 0.0, %v382
    %v384 = vpop.f32.mrb[0].mxu0
    %385 = vmatprep.mubr.f32.mxu0 0.0
    %386 = vmatmul.mubr.f32.gmra.mrb[0].mxu0 %v264
    %v387 = vpop.f32.mrb[0].mxu0
    %v388 = vadd.f32 0.0, %v387
    %v389 = vpop.f32.mrb[0].mxu0
    %390 = vmatprep.mubr.f32.mxu0 0.0
    %391 = vmatmul.mubr.f32.gmra.mrb[0].mxu0 %v267
    %v392 = vpop.f32.mrb[0].mxu0
    %v393 = vadd.f32 0.0, %v392
    %v394 = vpop.f32.mrb[0].mxu0
    %395 = vmatprep.mubr.f32.mxu0 0.0
    %396 = vmatmul.mubr.f32.gmra.mrb[0].mxu0 %v270
    %v397 = vpop.f32.mrb[0].mxu0
    %v398 = vadd.f32 0.0, %v397
    %v399 = vpop.f32.mrb[0].mxu0
    %400 = vmatprep.mubr.f32.mxu0 0.0
    %401 = vmatmul.mubr.f32.gmra.mrb[0].mxu0 %v273
    %v402 = vpop.f32.mrb[0].mxu0
    %v403 = vadd.f32 0.0, %v402
    %v404 = vpop.f32.mrb[0].mxu0
    %405 = vmatprep.mubr.f32.mxu0 0.0
    %406 = vmatmul.mubr.f32.gmra.mrb[0].mxu0 %v276
    %v407 = vpop.f32.mrb[0].mxu0
    %v408 = vadd.f32 0.0, %v407
    %v409 = vpop.f32.mrb[0].mxu0
    %410 = vmatprep.mubr.f32.mxu0 0.0
    %411 = vmatmul.mubr.f32.gmra.mrb[0].mxu0 %v279
    %v412 = vpop.f32.mrb[0].mxu0
    %v413 = vadd.f32 0.0, %v412
    %v414 = vpop.f32.mrb[0].mxu0
    %415 = vmatprep.mubr.f32.mxu0 0.0
    %416 = vmatmul.mubr.f32.gmra.mrb[0].mxu0 %v282
    %v417 = vpop.f32.mrb[0].mxu0
    %v418 = vadd.f32 0.0, %v417
    %v419 = vpop.f32.mrb[0].mxu0
    %420 = vmatprep.mubr.f32.mxu0 0.0
    %421 = vmatmul.mubr.f32.gmra.mrb[0].mxu0 %v285
    %v422 = vpop.f32.mrb[0].mxu0
    %v423 = vadd.f32 0.0, %v422
    %v424 = vpop.f32.mrb[0].mxu0
    %425 = vmatprep.mubr.f32.mxu0 0.0
    %426 = vmatmul.mubr.f32.gmra.mrb[0].mxu0 %v288
    %v427 = vpop.f32.mrb[0].mxu0
    %v428 = vadd.f32 0.0, %v427
    %v429 = vpop.f32.mrb[0].mxu0
    %430 = vmatprep.mubr.f32.mxu0 0.0
    %431 = vmatmul.mubr.f32.gmra.mrb[0].mxu0 %v291
    %v432 = vpop.f32.mrb[0].mxu0
    %v433 = vadd.f32 0.0, %v432
    %v434 = vpop.f32.mrb[0].mxu0
    %435 = vmatprep.mubr.f32.mxu0 0.0
    %436 = vmatmul.mubr.f32.gmra.mrb[0].mxu0 %v294
    %v437 = vpop.f32.mrb[0].mxu0
    %v438 = vadd.f32 0.0, %v437
    %v439 = vpop.f32.mrb[0].mxu0
    %440 = vdwg.mxu0
    %vm441 = vcmask 31744
    %v443 = vsel %vm441, %v363, 0
    %v446 = vsel %vm441, %v368, 0
    %v449 = vsel %vm441, %v373, 0
    %v452 = vsel %vm441, %v378, 0
    %v455 = vsel %vm441, %v383, 0
    %v458 = vsel %vm441, %v388, 0
    %v461 = vsel %vm441, %v393, 0
    %v464 = vsel %vm441, %v398, 0
    %v467 = vsel %vm441, %v403, 0
    %v470 = vsel %vm441, %v408, 0
    %v473 = vsel %vm441, %v413, 0
    %v476 = vsel %vm441, %v418, 0
    %v479 = vsel %vm441, %v423, 0
    %v482 = vsel %vm441, %v428, 0
    %v485 = vsel %vm441, %v433, 0
    %v488 = vsel %vm441, %v438, 0
    %vm490 = vcmask 1043456
    %v492 = vsel %vm490, %v246, 0
    %494 = vmatprep.subr.mxu0 0.0
    %495 = vmatpush1.msra.mxu0 %v492
    %496 = vmatprep.subr.mxu0 0.0
    %497 = vmatpush1.msra.mxu0 0.0
    %498 = vmatprep.subr.mxu0 0.0
    %499 = vmatpush1.msra.mxu0 0.0
    %500 = vmatprep.subr.mxu0 0.0
    %501 = vmatpush1.msra.mxu0 0.0
    %502 = vmatprep.subr.mxu0 0.0
    %503 = vmatpush1.msra.mxu0 0.0
    %504 = vmatprep.subr.mxu0 0.0
    %505 = vmatpush1.msra.mxu0 0.0
    %506 = vmatprep.subr.mxu0 0.0
    %507 = vmatpush1.msra.mxu0 0.0
    %508 = vmatprep.subr.mxu0 0.0
    %509 = vmatpush1.msra.mxu0 0.0
    %510 = vmatprep.subr.mxu0 0.0
    %511 = vmatpush1.msra.mxu0 0.0
    %512 = vmatprep.subr.mxu0 0.0
    %513 = vmatpush1.msra.mxu0 0.0
    %514 = vmatprep.subr.mxu0 0.0
    %515 = vmatpush1.msra.mxu0 0.0
    %516 = vmatprep.subr.mxu0 0.0
    %517 = vmatpush1.msra.mxu0 0.0
    %518 = vmatprep.subr.mxu0 0.0
    %519 = vmatpush1.msra.mxu0 0.0
    %520 = vmatprep.subr.mxu0 0.0
    %521 = vmatpush1.msra.mxu0 0.0
    %522 = vmatprep.subr.mxu0 0.0
    %523 = vmatpush1.msra.mxu0 0.0
    %524 = vmatprep.subr.mxu0 0.0
    %525 = vmatpush1.msra.mxu0 0.0
    %526 = vmatprep.subr.mxu0 0.0
    %527 = vmatpush1.msra.mxu0 0.0
    %528 = vmatprep.subr.mxu0 0.0
    %529 = vmatpush1.msra.mxu0 0.0
    %530 = vmatprep.subr.mxu0 0.0
    %531 = vmatpush1.msra.mxu0 0.0
    %532 = vmatprep.subr.mxu0 0.0
    %533 = vmatpush1.msra.mxu0 0.0
    %534 = vmatprep.subr.mxu0 0.0
    %535 = vmatpush1.msra.mxu0 0.0
    %536 = vmatprep.subr.mxu0 0.0
    %537 = vmatpush1.msra.mxu0 0.0
    %538 = vmatprep.subr.mxu0 0.0
    %539 = vmatpush1.msra.mxu0 0.0
    %540 = vmatprep.subr.mxu0 0.0
    %541 = vmatpush1.msra.mxu0 0.0
    %542 = vmatprep.subr.mxu0 0.0
    %543 = vmatpush1.msra.mxu0 0.0
    %544 = vmatprep.subr.mxu0 0.0
    %545 = vmatpush1.msra.mxu0 0.0
    %546 = vmatprep.subr.mxu0 0.0
    %547 = vmatpush1.msra.mxu0 0.0
    %548 = vmatprep.subr.mxu0 0.0
    %549 = vmatpush1.msra.mxu0 0.0
    %550 = vmatprep.subr.mxu0 0.0
    %551 = vmatpush1.msra.mxu0 0.0
    %552 = vmatprep.subr.mxu0 0.0
    %553 = vmatpush1.msra.mxu0 0.0
    %554 = vmatprep.subr.mxu0 0.0
    %555 = vmatpush1.msra.mxu0 0.0
    %556 = vmatprep.subr.mxu0 0.0
    %557 = vmatpush1.msra.mxu0 0.0
    %558 = vmatprep.mubr.f32.mxu0 0.0
    %559 = vmatmul.mubr.f32.gmra.mrb[0].mxu0 %v443
    %v560 = vpop.f32.mrb[0].mxu0
    %v561 = vadd.f32 0.0, %v560
    %v562 = vpop.f32.mrb[0].mxu0
    %563 = vmatprep.mubr.f32.mxu0 0.0
    %564 = vmatmul.mubr.f32.gmra.mrb[0].mxu0 %v446
    %v565 = vpop.f32.mrb[0].mxu0
    %v566 = vadd.f32 0.0, %v565
    %v567 = vpop.f32.mrb[0].mxu0
    %568 = vmatprep.mubr.f32.mxu0 0.0
    %569 = vmatmul.mubr.f32.gmra.mrb[0].mxu0 %v449
    %v570 = vpop.f32.mrb[0].mxu0
    %v571 = vadd.f32 0.0, %v570
    %v572 = vpop.f32.mrb[0].mxu0
    %573 = vmatprep.mubr.f32.mxu0 0.0
    %574 = vmatmul.mubr.f32.gmra.mrb[0].mxu0 %v452
    %v575 = vpop.f32.mrb[0].mxu0
    %v576 = vadd.f32 0.0, %v575
    %v577 = vpop.f32.mrb[0].mxu0
    %578 = vmatprep.mubr.f32.mxu0 0.0
    %579 = vmatmul.mubr.f32.gmra.mrb[0].mxu0 %v455
    %v580 = vpop.f32.mrb[0].mxu0
    %v581 = vadd.f32 0.0, %v580
    %v582 = vpop.f32.mrb[0].mxu0
    %583 = vmatprep.mubr.f32.mxu0 0.0
    %584 = vmatmul.mubr.f32.gmra.mrb[0].mxu0 %v458
    %v585 = vpop.f32.mrb[0].mxu0
    %v586 = vadd.f32 0.0, %v585
    %v587 = vpop.f32.mrb[0].mxu0
    %588 = vmatprep.mubr.f32.mxu0 0.0
    %589 = vmatmul.mubr.f32.gmra.mrb[0].mxu0 %v461
    %v590 = vpop.f32.mrb[0].mxu0
    %v591 = vadd.f32 0.0, %v590
    %v592 = vpop.f32.mrb[0].mxu0
    %593 = vmatprep.mubr.f32.mxu0 0.0
    %594 = vmatmul.mubr.f32.gmra.mrb[0].mxu0 %v464
    %v595 = vpop.f32.mrb[0].mxu0
    %v596 = vadd.f32 0.0, %v595
    %v597 = vpop.f32.mrb[0].mxu0
    %598 = vmatprep.mubr.f32.mxu0 0.0
    %599 = vmatmul.mubr.f32.gmra.mrb[0].mxu0 %v467
    %v600 = vpop.f32.mrb[0].mxu0
    %v601 = vadd.f32 0.0, %v600
    %v602 = vpop.f32.mrb[0].mxu0
    %603 = vmatprep.mubr.f32.mxu0 0.0
    %604 = vmatmul.mubr.f32.gmra.mrb[0].mxu0 %v470
    %v605 = vpop.f32.mrb[0].mxu0
    %v606 = vadd.f32 0.0, %v605
    %v607 = vpop.f32.mrb[0].mxu0
    %608 = vmatprep.mubr.f32.mxu0 0.0
    %609 = vmatmul.mubr.f32.gmra.mrb[0].mxu0 %v473
    %v610 = vpop.f32.mrb[0].mxu0
    %v611 = vadd.f32 0.0, %v610
    %v612 = vpop.f32.mrb[0].mxu0
    %613 = vmatprep.mubr.f32.mxu0 0.0
    %614 = vmatmul.mubr.f32.gmra.mrb[0].mxu0 %v476
    %v615 = vpop.f32.mrb[0].mxu0
    %v616 = vadd.f32 0.0, %v615
    %v617 = vpop.f32.mrb[0].mxu0
    %618 = vmatprep.mubr.f32.mxu0 0.0
    %619 = vmatmul.mubr.f32.gmra.mrb[0].mxu0 %v479
    %v620 = vpop.f32.mrb[0].mxu0
    %v621 = vadd.f32 0.0, %v620
    %v622 = vpop.f32.mrb[0].mxu0
    %623 = vmatprep.mubr.f32.mxu0 0.0
    %624 = vmatmul.mubr.f32.gmra.mrb[0].mxu0 %v482
    %v625 = vpop.f32.mrb[0].mxu0
    %v626 = vadd.f32 0.0, %v625
    %v627 = vpop.f32.mrb[0].mxu0
    %628 = vmatprep.mubr.f32.mxu0 0.0
    %629 = vmatmul.mubr.f32.gmra.mrb[0].mxu0 %v485
    %v630 = vpop.f32.mrb[0].mxu0
    %v631 = vadd.f32 0.0, %v630
    %v632 = vpop.f32.mrb[0].mxu0
    %633 = vmatprep.mubr.f32.mxu0 0.0
    %634 = vmatmul.mubr.f32.gmra.mrb[0].mxu0 %v488
    %v635 = vpop.f32.mrb[0].mxu0
    %v636 = vadd.f32 0.0, %v635
    %v637 = vpop.f32.mrb[0].mxu0
    %638 = vdwg.mxu0
    %v639 = vmul.f32 %v561, 0.0625
    %v640 = vmul.f32 %v566, 0.0625
    %v641 = vmul.f32 %v571, 0.0625
    %v642 = vmul.f32 %v576, 0.0625
    %v643 = vmul.f32 %v581, 0.0625
    %v644 = vmul.f32 %v586, 0.0625
    %v645 = vmul.f32 %v591, 0.0625
    %v646 = vmul.f32 %v596, 0.0625
    %v647 = vmul.f32 %v601, 0.0625
    %v648 = vmul.f32 %v606, 0.0625
    %v649 = vmul.f32 %v611, 0.0625
    %v650 = vmul.f32 %v616, 0.0625
    %v651 = vmul.f32 %v621, 0.0625
    %v652 = vmul.f32 %v626, 0.0625
    %v653 = vmul.f32 %v631, 0.0625
    %v654 = vmul.f32 %v636, 0.0625
    %v655 = vsub.f32 %v160, %v639
    %v656 = vsub.f32 %v165, %v640
    %v657 = vsub.f32 %v170, %v641
    %v658 = vsub.f32 %v175, %v642
    %v659 = vsub.f32 %v180, %v643
    %v660 = vsub.f32 %v185, %v644
    %v661 = vsub.f32 %v190, %v645
    %v662 = vsub.f32 %v195, %v646
    %v663 = vsub.f32 %v200, %v647
    %v664 = vsub.f32 %v205, %v648
    %v665 = vsub.f32 %v210, %v649
    %v666 = vsub.f32 %v215, %v650
    %v667 = vsub.f32 %v220, %v651
    %v668 = vsub.f32 %v225, %v652
    %v669 = vsub.f32 %v230, %v653
    %v670 = vsub.f32 %v235, %v654
    %v671 = vmul.f32 %v655, %v655
    %v672 = vmul.f32 %v656, %v656
    %v673 = vmul.f32 %v657, %v657
    %v674 = vmul.f32 %v658, %v658
    %v675 = vmul.f32 %v659, %v659
    %v676 = vmul.f32 %v660, %v660
    %v677 = vmul.f32 %v661, %v661
    %v678 = vmul.f32 %v662, %v662
    %v679 = vmul.f32 %v663, %v663
    %v680 = vmul.f32 %v664, %v664
    %v681 = vmul.f32 %v665, %v665
    %v682 = vmul.f32 %v666, %v666
    %v683 = vmul.f32 %v667, %v667
    %v684 = vmul.f32 %v668, %v668
    %v685 = vmul.f32 %v669, %v669
    %v686 = vmul.f32 %v670, %v670
    %v688 = vsel %vm247, %v671, 0
    %v691 = vsel %vm247, %v672, 0
    %v694 = vsel %vm247, %v673, 0
    %v697 = vsel %vm247, %v674, 0
    %v700 = vsel %vm247, %v675, 0
    %v703 = vsel %vm247, %v676, 0
    %v706 = vsel %vm247, %v677, 0
    %v709 = vsel %vm247, %v678, 0
    %v712 = vsel %vm247, %v679, 0
    %v715 = vsel %vm247, %v680, 0
    %v718 = vsel %vm247, %v681, 0
    %v721 = vsel %vm247, %v682, 0
    %v724 = vsel %vm247, %v683, 0
    %v727 = vsel %vm247, %v684, 0
    %v730 = vsel %vm247, %v685, 0
    %v733 = vsel %vm247, %v686, 0
    %735 = vmatprep.subr.mxu0 0.0
    %736 = vmatpush1.msra.mxu0 %v238
    %737 = vmatprep.subr.mxu0 0.0
    %738 = vmatpush1.msra.mxu0 %v239
    %739 = vmatprep.subr.mxu0 0.0
    %740 = vmatpush1.msra.mxu0 %v240
    %741 = vmatprep.subr.mxu0 0.0
    %742 = vmatpush1.msra.mxu0 %v241
    %743 = vmatprep.subr.mxu0 0.0
    %744 = vmatpush1.msra.mxu0 %v242
    %745 = vmatprep.subr.mxu0 0.0
    %746 = vmatpush1.msra.mxu0 %v243
    %747 = vmatprep.subr.mxu0 0.0
    %748 = vmatpush1.msra.mxu0 %v244
    %749 = vmatprep.subr.mxu0 0.0
    %750 = vmatpush1.msra.mxu0 %v245
    %751 = vmatprep.subr.mxu0 0.0
    %752 = vmatpush1.msra.mxu0 0.0
    %753 = vmatprep.subr.mxu0 0.0
    %754 = vmatpush1.msra.mxu0 0.0
    %755 = vmatprep.subr.mxu0 0.0
    %756 = vmatpush1.msra.mxu0 0.0
    %757 = vmatprep.subr.mxu0 0.0
    %758 = vmatpush1.msra.mxu0 0.0
    %759 = vmatprep.subr.mxu0 0.0
    %760 = vmatpush1.msra.mxu0 0.0
    %761 = vmatprep.subr.mxu0 0.0
    %762 = vmatpush1.msra.mxu0 0.0
    %763 = vmatprep.subr.mxu0 0.0
    %764 = vmatpush1.msra.mxu0 0.0
    %765 = vmatprep.subr.mxu0 0.0
    %766 = vmatpush1.msra.mxu0 0.0
    %767 = vmatprep.subr.mxu0 0.0
    %768 = vmatpush1.msra.mxu0 0.0
    %769 = vmatprep.subr.mxu0 0.0
    %770 = vmatpush1.msra.mxu0 0.0
    %771 = vmatprep.subr.mxu0 0.0
    %772 = vmatpush1.msra.mxu0 0.0
    %773 = vmatprep.subr.mxu0 0.0
    %774 = vmatpush1.msra.mxu0 0.0
    %775 = vmatprep.subr.mxu0 0.0
    %776 = vmatpush1.msra.mxu0 0.0
    %777 = vmatprep.subr.mxu0 0.0
    %778 = vmatpush1.msra.mxu0 0.0
    %779 = vmatprep.subr.mxu0 0.0
    %780 = vmatpush1.msra.mxu0 0.0
    %781 = vmatprep.subr.mxu0 0.0
    %782 = vmatpush1.msra.mxu0 0.0
    %783 = vmatprep.subr.mxu0 0.0
    %784 = vmatpush1.msra.mxu0 0.0
    %785 = vmatprep.subr.mxu0 0.0
    %786 = vmatpush1.msra.mxu0 0.0
    %787 = vmatprep.subr.mxu0 0.0
    %788 = vmatpush1.msra.mxu0 0.0
    %789 = vmatprep.subr.mxu0 0.0
    %790 = vmatpush1.msra.mxu0 0.0
    %791 = vmatprep.subr.mxu0 0.0
    %792 = vmatpush1.msra.mxu0 0.0
    %793 = vmatprep.subr.mxu0 0.0
    %794 = vmatpush1.msra.mxu0 0.0
    %795 = vmatprep.subr.mxu0 0.0
    %796 = vmatpush1.msra.mxu0 0.0
    %797 = vmatprep.subr.mxu0 0.0
    %798 = vmatpush1.msra.mxu0 0.0
    %799 = vmatprep.mubr.f32.mxu0 0.0
    %800 = vmatmul.mubr.f32.gmra.mrb[0].mxu0 %v688
    %v801 = vpop.f32.mrb[0].mxu0
    %v802 = vadd.f32 0.0, %v801
    %v803 = vpop.f32.mrb[0].mxu0
    %804 = vmatprep.mubr.f32.mxu0 0.0
    %805 = vmatmul.mubr.f32.gmra.mrb[0].mxu0 %v691
    %v806 = vpop.f32.mrb[0].mxu0
    %v807 = vadd.f32 0.0, %v806
    %v808 = vpop.f32.mrb[0].mxu0
    %809 = vmatprep.mubr.f32.mxu0 0.0
    %810 = vmatmul.mubr.f32.gmra.mrb[0].mxu0 %v694
    %v811 = vpop.f32.mrb[0].mxu0
    %v812 = vadd.f32 0.0, %v811
    %v813 = vpop.f32.mrb[0].mxu0
    %814 = vmatprep.mubr.f32.mxu0 0.0
    %815 = vmatmul.mubr.f32.gmra.mrb[0].mxu0 %v697
    %v816 = vpop.f32.mrb[0].mxu0
    %v817 = vadd.f32 0.0, %v816
    %v818 = vpop.f32.mrb[0].mxu0
    %819 = vmatprep.mubr.f32.mxu0 0.0
    %820 = vmatmul.mubr.f32.gmra.mrb[0].mxu0 %v700
    %v821 = vpop.f32.mrb[0].mxu0
    %v822 = vadd.f32 0.0, %v821
    %v823 = vpop.f32.mrb[0].mxu0
    %824 = vmatprep.mubr.f32.mxu0 0.0
    %825 = vmatmul.mubr.f32.gmra.mrb[0].mxu0 %v703
    %v826 = vpop.f32.mrb[0].mxu0
    %v827 = vadd.f32 0.0, %v826
    %v828 = vpop.f32.mrb[0].mxu0
    %829 = vmatprep.mubr.f32.mxu0 0.0
    %830 = vmatmul.mubr.f32.gmra.mrb[0].mxu0 %v706
    %v831 = vpop.f32.mrb[0].mxu0
    %v832 = vadd.f32 0.0, %v831
    %v833 = vpop.f32.mrb[0].mxu0
    %834 = vmatprep.mubr.f32.mxu0 0.0
    %835 = vmatmul.mubr.f32.gmra.mrb[0].mxu0 %v709
    %v836 = vpop.f32.mrb[0].mxu0
    %v837 = vadd.f32 0.0, %v836
    %v838 = vpop.f32.mrb[0].mxu0
    %839 = vmatprep.mubr.f32.mxu0 0.0
    %840 = vmatmul.mubr.f32.gmra.mrb[0].mxu0 %v712
    %v841 = vpop.f32.mrb[0].mxu0
    %v842 = vadd.f32 0.0, %v841
    %v843 = vpop.f32.mrb[0].mxu0
    %844 = vmatprep.mubr.f32.mxu0 0.0
    %845 = vmatmul.mubr.f32.gmra.mrb[0].mxu0 %v715
    %v846 = vpop.f32.mrb[0].mxu0
    %v847 = vadd.f32 0.0, %v846
    %v848 = vpop.f32.mrb[0].mxu0
    %849 = vmatprep.mubr.f32.mxu0 0.0
    %850 = vmatmul.mubr.f32.gmra.mrb[0].mxu0 %v718
    %v851 = vpop.f32.mrb[0].mxu0
    %v852 = vadd.f32 0.0, %v851
    %v853 = vpop.f32.mrb[0].mxu0
    %854 = vmatprep.mubr.f32.mxu0 0.0
    %855 = vmatmul.mubr.f32.gmra.mrb[0].mxu0 %v721
    %v856 = vpop.f32.mrb[0].mxu0
    %v857 = vadd.f32 0.0, %v856
    %v858 = vpop.f32.mrb[0].mxu0
    %859 = vmatprep.mubr.f32.mxu0 0.0
    %860 = vmatmul.mubr.f32.gmra.mrb[0].mxu0 %v724
    %v861 = vpop.f32.mrb[0].mxu0
    %v862 = vadd.f32 0.0, %v861
    %v863 = vpop.f32.mrb[0].mxu0
    %864 = vmatprep.mubr.f32.mxu0 0.0
    %865 = vmatmul.mubr.f32.gmra.mrb[0].mxu0 %v727
    %v866 = vpop.f32.mrb[0].mxu0
    %v867 = vadd.f32 0.0, %v866
    %v868 = vpop.f32.mrb[0].mxu0
    %869 = vmatprep.mubr.f32.mxu0 0.0
    %870 = vmatmul.mubr.f32.gmra.mrb[0].mxu0 %v730
    %v871 = vpop.f32.mrb[0].mxu0
    %v872 = vadd.f32 0.0, %v871
    %v873 = vpop.f32.mrb[0].mxu0
    %874 = vmatprep.mubr.f32.mxu0 0.0
    %875 = vmatmul.mubr.f32.gmra.mrb[0].mxu0 %v733
    %v876 = vpop.f32.mrb[0].mxu0
    %v877 = vadd.f32 0.0, %v876
    %v878 = vpop.f32.mrb[0].mxu0
    %879 = vdwg.mxu0
    %v881 = vsel %vm441, %v802, 0
    %v884 = vsel %vm441, %v807, 0
    %v887 = vsel %vm441, %v812, 0
    %v890 = vsel %vm441, %v817, 0
    %v893 = vsel %vm441, %v822, 0
    %v896 = vsel %vm441, %v827, 0
    %v899 = vsel %vm441, %v832, 0
    %v902 = vsel %vm441, %v837, 0
    %v905 = vsel %vm441, %v842, 0
    %v908 = vsel %vm441, %v847, 0
    %v911 = vsel %vm441, %v852, 0
    %v914 = vsel %vm441, %v857, 0
    %v917 = vsel %vm441, %v862, 0
    %v920 = vsel %vm441, %v867, 0
    %v923 = vsel %vm441, %v872, 0
    %v926 = vsel %vm441, %v877, 0
    %928 = vmatprep.subr.mxu0 0.0
    %929 = vmatpush1.msra.mxu0 %v492
    %930 = vmatprep.subr.mxu0 0.0
    %931 = vmatpush1.msra.mxu0 0.0
    %932 = vmatprep.subr.mxu0 0.0
    %933 = vmatpush1.msra.mxu0 0.0
    %934 = vmatprep.subr.mxu0 0.0
    %935 = vmatpush1.msra.mxu0 0.0
    %936 = vmatprep.subr.mxu0 0.0
    %937 = vmatpush1.msra.mxu0 0.0
    %938 = vmatprep.subr.mxu0 0.0
    %939 = vmatpush1.msra.mxu0 0.0
    %940 = vmatprep.subr.mxu0 0.0
    %941 = vmatpush1.msra.mxu0 0.0
    %942 = vmatprep.subr.mxu0 0.0
    %943 = vmatpush1.msra.mxu0 0.0
    %944 = vmatprep.subr.mxu0 0.0
    %945 = vmatpush1.msra.mxu0 0.0
    %946 = vmatprep.subr.mxu0 0.0
    %947 = vmatpush1.msra.mxu0 0.0
    %948 = vmatprep.subr.mxu0 0.0
    %949 = vmatpush1.msra.mxu0 0.0
    %950 = vmatprep.subr.mxu0 0.0
    %951 = vmatpush1.msra.mxu0 0.0
    %952 = vmatprep.subr.mxu0 0.0
    %953 = vmatpush1.msra.mxu0 0.0
    %954 = vmatprep.subr.mxu0 0.0
    %955 = vmatpush1.msra.mxu0 0.0
    %956 = vmatprep.subr.mxu0 0.0
    %957 = vmatpush1.msra.mxu0 0.0
    %958 = vmatprep.subr.mxu0 0.0
    %959 = vmatpush1.msra.mxu0 0.0
    %960 = vmatprep.subr.mxu0 0.0
    %961 = vmatpush1.msra.mxu0 0.0
    %962 = vmatprep.subr.mxu0 0.0
    %963 = vmatpush1.msra.mxu0 0.0
    %964 = vmatprep.subr.mxu0 0.0
    %965 = vmatpush1.msra.mxu0 0.0
    %966 = vmatprep.subr.mxu0 0.0
    %967 = vmatpush1.msra.mxu0 0.0
    %968 = vmatprep.subr.mxu0 0.0
    %969 = vmatpush1.msra.mxu0 0.0
    %970 = vmatprep.subr.mxu0 0.0
    %971 = vmatpush1.msra.mxu0 0.0
    %972 = vmatprep.subr.mxu0 0.0
    %973 = vmatpush1.msra.mxu0 0.0
    %974 = vmatprep.subr.mxu0 0.0
    %975 = vmatpush1.msra.mxu0 0.0
    %976 = vmatprep.subr.mxu0 0.0
    %977 = vmatpush1.msra.mxu0 0.0
    %978 = vmatprep.subr.mxu0 0.0
    %979 = vmatpush1.msra.mxu0 0.0
    %980 = vmatprep.subr.mxu0 0.0
    %981 = vmatpush1.msra.mxu0 0.0
    %982 = vmatprep.subr.mxu0 0.0
    %983 = vmatpush1.msra.mxu0 0.0
    %984 = vmatprep.subr.mxu0 0.0
    %985 = vmatpush1.msra.mxu0 0.0
    %986 = vmatprep.subr.mxu0 0.0
    %987 = vmatpush1.msra.mxu0 0.0
    %988 = vmatprep.subr.mxu0 0.0
    %989 = vmatpush1.msra.mxu0 0.0
    %990 = vmatprep.subr.mxu0 0.0
    %991 = vmatpush1.msra.mxu0 0.0
    %992 = vmatprep.mubr.f32.mxu0 0.0
    %993 = vmatmul.mubr.f32.gmra.mrb[0].mxu0 %v881
    %v994 = vpop.f32.mrb[0].mxu0
    %v995 = vadd.f32 0.0, %v994
    %v996 = vpop.f32.mrb[0].mxu0
    %997 = vmatprep.mubr.f32.mxu0 0.0
    %998 = vmatmul.mubr.f32.gmra.mrb[0].mxu0 %v884
    %v999 = vpop.f32.mrb[0].mxu0
    %v1000 = vadd.f32 0.0, %v999
    %v1001 = vpop.f32.mrb[0].mxu0
    %1002 = vmatprep.mubr.f32.mxu0 0.0
    %1003 = vmatmul.mubr.f32.gmra.mrb[0].mxu0 %v887
    %v1004 = vpop.f32.mrb[0].mxu0
    %v1005 = vadd.f32 0.0, %v1004
    %v1006 = vpop.f32.mrb[0].mxu0
    %1007 = vmatprep.mubr.f32.mxu0 0.0
    %1008 = vmatmul.mubr.f32.gmra.mrb[0].mxu0 %v890
    %v1009 = vpop.f32.mrb[0].mxu0
    %v1010 = vadd.f32 0.0, %v1009
    %v1011 = vpop.f32.mrb[0].mxu0
    %1012 = vmatprep.mubr.f32.mxu0 0.0
    %1013 = vmatmul.mubr.f32.gmra.mrb[0].mxu0 %v893
    %v1014 = vpop.f32.mrb[0].mxu0
    %v1015 = vadd.f32 0.0, %v1014
    %v1016 = vpop.f32.mrb[0].mxu0
    %1017 = vmatprep.mubr.f32.mxu0 0.0
    %1018 = vmatmul.mubr.f32.gmra.mrb[0].mxu0 %v896
    %v1019 = vpop.f32.mrb[0].mxu0
    %v1020 = vadd.f32 0.0, %v1019
    %v1021 = vpop.f32.mrb[0].mxu0
    %1022 = vmatprep.mubr.f32.mxu0 0.0
    %1023 = vmatmul.mubr.f32.gmra.mrb[0].mxu0 %v899
    %v1024 = vpop.f32.mrb[0].mxu0
    %v1025 = vadd.f32 0.0, %v1024
    %v1026 = vpop.f32.mrb[0].mxu0
    %1027 = vmatprep.mubr.f32.mxu0 0.0
    %1028 = vmatmul.mubr.f32.gmra.mrb[0].mxu0 %v902
    %v1029 = vpop.f32.mrb[0].mxu0
    %v1030 = vadd.f32 0.0, %v1029
    %v1031 = vpop.f32.mrb[0].mxu0
    %1032 = vmatprep.mubr.f32.mxu0 0.0
    %1033 = vmatmul.mubr.f32.gmra.mrb[0].mxu0 %v905
    %v1034 = vpop.f32.mrb[0].mxu0
    %v1035 = vadd.f32 0.0, %v1034
    %v1036 = vpop.f32.mrb[0].mxu0
    %1037 = vmatprep.mubr.f32.mxu0 0.0
    %1038 = vmatmul.mubr.f32.gmra.mrb[0].mxu0 %v908
    %v1039 = vpop.f32.mrb[0].mxu0
    %v1040 = vadd.f32 0.0, %v1039
    %v1041 = vpop.f32.mrb[0].mxu0
    %1042 = vmatprep.mubr.f32.mxu0 0.0
    %1043 = vmatmul.mubr.f32.gmra.mrb[0].mxu0 %v911
    %v1044 = vpop.f32.mrb[0].mxu0
    %v1045 = vadd.f32 0.0, %v1044
    %v1046 = vpop.f32.mrb[0].mxu0
    %1047 = vmatprep.mubr.f32.mxu0 0.0
    %1048 = vmatmul.mubr.f32.gmra.mrb[0].mxu0 %v914
    %v1049 = vpop.f32.mrb[0].mxu0
    %v1050 = vadd.f32 0.0, %v1049
    %v1051 = vpop.f32.mrb[0].mxu0
    %1052 = vmatprep.mubr.f32.mxu0 0.0
    %1053 = vmatmul.mubr.f32.gmra.mrb[0].mxu0 %v917
    %v1054 = vpop.f32.mrb[0].mxu0
    %v1055 = vadd.f32 0.0, %v1054
    %v1056 = vpop.f32.mrb[0].mxu0
    %1057 = vmatprep.mubr.f32.mxu0 0.0
    %1058 = vmatmul.mubr.f32.gmra.mrb[0].mxu0 %v920
    %v1059 = vpop.f32.mrb[0].mxu0
    %v1060 = vadd.f32 0.0, %v1059
    %v1061 = vpop.f32.mrb[0].mxu0
    %1062 = vmatprep.mubr.f32.mxu0 0.0
    %1063 = vmatmul.mubr.f32.gmra.mrb[0].mxu0 %v923
    %v1064 = vpop.f32.mrb[0].mxu0
    %v1065 = vadd.f32 0.0, %v1064
    %v1066 = vpop.f32.mrb[0].mxu0
    %1067 = vmatprep.mubr.f32.mxu0 0.0
    %1068 = vmatmul.mubr.f32.gmra.mrb[0].mxu0 %v926
    %v1069 = vpop.f32.mrb[0].mxu0
    %v1070 = vadd.f32 0.0, %v1069
    %v1071 = vpop.f32.mrb[0].mxu0
    %1072 = vdwg.mxu0
    %v1073 = vmul.f32 %v995, 0.0625
    %v1074 = vmul.f32 %v1000, 0.0625
    %v1075 = vmul.f32 %v1005, 0.0625
    %v1076 = vmul.f32 %v1010, 0.0625
    %v1077 = vmul.f32 %v1015, 0.0625
    %v1078 = vmul.f32 %v1020, 0.0625
    %v1079 = vmul.f32 %v1025, 0.0625
    %v1080 = vmul.f32 %v1030, 0.0625
    %v1081 = vmul.f32 %v1035, 0.0625
    %v1082 = vmul.f32 %v1040, 0.0625
    %v1083 = vmul.f32 %v1045, 0.0625
    %v1084 = vmul.f32 %v1050, 0.0625
    %v1085 = vmul.f32 %v1055, 0.0625
    %v1086 = vmul.f32 %v1060, 0.0625
    %v1087 = vmul.f32 %v1065, 0.0625
    %v1088 = vmul.f32 %v1070, 0.0625
    %v1089 = vadd.f32 %v1073, 1e-05
    %v1090 = vadd.f32 %v1074, 1e-05
    %v1091 = vadd.f32 %v1075, 1e-05
    %v1092 = vadd.f32 %v1076, 1e-05
    %v1093 = vadd.f32 %v1077, 1e-05
    %v1094 = vadd.f32 %v1078, 1e-05
    %v1095 = vadd.f32 %v1079, 1e-05
    %v1096 = vadd.f32 %v1080, 1e-05
    %v1097 = vadd.f32 %v1081, 1e-05
    %v1098 = vadd.f32 %v1082, 1e-05
    %v1099 = vadd.f32 %v1083, 1e-05
    %v1100 = vadd.f32 %v1084, 1e-05
    %v1101 = vadd.f32 %v1085, 1e-05
    %v1102 = vadd.f32 %v1086, 1e-05
    %v1103 = vadd.f32 %v1087, 1e-05
    %v1104 = vadd.f32 %v1088, 1e-05
    %v1105 = vrsqrt.pop %v1089
    %v1106 = vrsqrt.pop %v1090
    %v1107 = vrsqrt.pop %v1091
    %v1108 = vrsqrt.pop %v1092
    %v1109 = vrsqrt.pop %v1093
    %v1110 = vrsqrt.pop %v1094
    %v1111 = vrsqrt.pop %v1095
    %v1112 = vrsqrt.pop %v1096
    %v1113 = vrsqrt.pop %v1097
    %v1114 = vrsqrt.pop %v1098
    %v1115 = vrsqrt.pop %v1099
    %v1116 = vrsqrt.pop %v1100
    %v1117 = vrsqrt.pop %v1101
    %v1118 = vrsqrt.pop %v1102
    %v1119 = vrsqrt.pop %v1103
    %v1120 = vrsqrt.pop %v1104
    %v1121 = vmul.f32 %v655, %v1105
    %v1122 = vmul.f32 %v656, %v1106
    %v1123 = vmul.f32 %v657, %v1107
    %v1124 = vmul.f32 %v658, %v1108
    %v1125 = vmul.f32 %v659, %v1109
    %v1126 = vmul.f32 %v660, %v1110
    %v1127 = vmul.f32 %v661, %v1111
    %v1128 = vmul.f32 %v662, %v1112
    %v1129 = vmul.f32 %v663, %v1113
    %v1130 = vmul.f32 %v664, %v1114
    %v1131 = vmul.f32 %v665, %v1115
    %v1132 = vmul.f32 %v666, %v1116
    %v1133 = vmul.f32 %v667, %v1117
    %v1134 = vmul.f32 %v668, %v1118
    %v1135 = vmul.f32 %v669, %v1119
    %v1136 = vmul.f32 %v670, %v1120
    %v1137 = vld [vmem:[%s4] sm:$0x1]
    %v1139 = vlaneseq
    %v1140 = vshrl.u32 %v1139, 7
    %v1141 = vsub.s32 0, %v1140
    %v1142 = vrot.slane %v1137, %v1141
    %v1144 = vmul.f32 %v1121, %v1142
    %v1145 = vmul.f32 %v1122, %v1142
    %v1146 = vmul.f32 %v1123, %v1142
    %v1147 = vmul.f32 %v1124, %v1142
    %v1148 = vmul.f32 %v1125, %v1142
    %v1149 = vmul.f32 %v1126, %v1142
    %v1150 = vmul.f32 %v1127, %v1142
    %v1151 = vmul.f32 %v1128, %v1142
    %v1152 = vmul.f32 %v1129, %v1142
    %v1153 = vmul.f32 %v1130, %v1142
    %v1154 = vmul.f32 %v1131, %v1142
    %v1155 = vmul.f32 %v1132, %v1142
    %v1156 = vmul.f32 %v1133, %v1142
    %v1157 = vmul.f32 %v1134, %v1142
    %v1158 = vmul.f32 %v1135, %v1142
    %v1159 = vmul.f32 %v1136, %v1142
    %v1160 = vld [vmem:[%s5] sm:$0x1]
    %v1162 = vlaneseq
    %v1163 = vshrl.u32 %v1162, 7
    %v1164 = vsub.s32 0, %v1163
    %v1165 = vrot.slane %v1160, %v1164
    %v1167 = vadd.f32 %v1144, %v1165
    %v1168 = vadd.f32 %v1145, %v1165
    %v1169 = vadd.f32 %v1146, %v1165
    %v1170 = vadd.f32 %v1147, %v1165
    %v1171 = vadd.f32 %v1148, %v1165
    %v1172 = vadd.f32 %v1149, %v1165
    %v1173 = vadd.f32 %v1150, %v1165
    %v1174 = vadd.f32 %v1151, %v1165
    %v1175 = vadd.f32 %v1152, %v1165
    %v1176 = vadd.f32 %v1153, %v1165
    %v1177 = vadd.f32 %v1154, %v1165
    %v1178 = vadd.f32 %v1155, %v1165
    %v1179 = vadd.f32 %v1156, %v1165
    %v1180 = vadd.f32 %v1157, %v1165
    %v1181 = vadd.f32 %v1158, %v1165
    %v1182 = vadd.f32 %v1159, %v1165
    %1183 = vst.msk [vmem:[#allocation2] sm:$0xff] %vm44, %v1167
    %1184 = vst.msk [vmem:[#allocation2 + $0x10] sm:$0xff] %vm44, %v1168
    %1185 = vst.msk [vmem:[#allocation2 + $0x20] sm:$0xff] %vm44, %v1169
    %1186 = vst.msk [vmem:[#allocation2 + $0x30] sm:$0xff] %vm44, %v1170
    %1187 = vst.msk [vmem:[#allocation2 + $0x40] sm:$0xff] %vm44, %v1171
    %1188 = vst.msk [vmem:[#allocation2 + $0x50] sm:$0xff] %vm44, %v1172
    %1189 = vst.msk [vmem:[#allocation2 + $0x60] sm:$0xff] %vm44, %v1173
    %1190 = vst.msk [vmem:[#allocation2 + $0x70] sm:$0xff] %vm44, %v1174
    %1191 = vst.msk [vmem:[#allocation2 + $0x80] sm:$0xff] %vm44, %v1175
    %1192 = vst.msk [vmem:[#allocation2 + $0x90] sm:$0xff] %vm44, %v1176
    %1193 = vst.msk [vmem:[#allocation2 + $0xa0] sm:$0xff] %vm44, %v1177
    %1194 = vst.msk [vmem:[#allocation2 + $0xb0] sm:$0xff] %vm44, %v1178
    %1195 = vst.msk [vmem:[#allocation2 + $0xc0] sm:$0xff] %vm44, %v1179
    %1196 = vst.msk [vmem:[#allocation2 + $0xd0] sm:$0xff] %vm44, %v1180
    %1197 = vst.msk [vmem:[#allocation2 + $0xe0] sm:$0xff] %vm44, %v1181
    %1198 = vst.msk [vmem:[#allocation2 + $0xf0] sm:$0xff] %vm44, %v1182
    %1215 = vrot.lane.b32.xlu0 %v1167, 96
    %v1216 = vpop.permute.xlu0 %1215
    %1217 = vrot.lane.b32.xlu0 %v1168, 96
    %v1218 = vpop.permute.xlu0 %1217
    %1219 = vrot.lane.b32.xlu0 %v1169, 96
    %v1220 = vpop.permute.xlu0 %1219
    %1221 = vrot.lane.b32.xlu0 %v1170, 96
    %v1222 = vpop.permute.xlu0 %1221
    %1223 = vrot.lane.b32.xlu0 %v1171, 96
    %v1224 = vpop.permute.xlu0 %1223
    %1225 = vrot.lane.b32.xlu0 %v1172, 96
    %v1226 = vpop.permute.xlu0 %1225
    %1227 = vrot.lane.b32.xlu0 %v1173, 96
    %v1228 = vpop.permute.xlu0 %1227
    %1229 = vrot.lane.b32.xlu0 %v1174, 96
    %v1230 = vpop.permute.xlu0 %1229
    %1231 = vrot.lane.b32.xlu0 %v1175, 96
    %v1232 = vpop.permute.xlu0 %1231
    %1233 = vrot.lane.b32.xlu0 %v1176, 96
    %v1234 = vpop.permute.xlu0 %1233
    %1235 = vrot.lane.b32.xlu0 %v1177, 96
    %v1236 = vpop.permute.xlu0 %1235
    %1237 = vrot.lane.b32.xlu0 %v1178, 96
    %v1238 = vpop.permute.xlu0 %1237
    %1239 = vrot.lane.b32.xlu0 %v1179, 96
    %v1240 = vpop.permute.xlu0 %1239
    %1241 = vrot.lane.b32.xlu0 %v1180, 96
    %v1242 = vpop.permute.xlu0 %1241
    %1243 = vrot.lane.b32.xlu0 %v1181, 96
    %v1244 = vpop.permute.xlu0 %1243
    %1245 = vrot.lane.b32.xlu0 %v1182, 96
    %v1246 = vpop.permute.xlu0 %1245
    %s1263 = scalar_lea.vmem [#allocation2], 8
    %1264 = vst.msk [vmem:[%s1263] sm:$0xff] %vm44, %v1216
    %1265 = vst.msk [vmem:[%s1263 + $0x10] sm:$0xff] %vm44, %v1218
    %1266 = vst.msk [vmem:[%s1263 + $0x20] sm:$0xff] %vm44, %v1220
    %1267 = vst.msk [vmem:[%s1263 + $0x30] sm:$0xff] %vm44, %v1222
    %1268 = vst.msk [vmem:[%s1263 + $0x40] sm:$0xff] %vm44, %v1224
    %1269 = vst.msk [vmem:[%s1263 + $0x50] sm:$0xff] %vm44, %v1226
    %1270 = vst.msk [vmem:[%s1263 + $0x60] sm:$0xff] %vm44, %v1228
    %1271 = vst.msk [vmem:[%s1263 + $0x70] sm:$0xff] %vm44, %v1230
    %1272 = vst.msk [vmem:[%s1263 + $0x80] sm:$0xff] %vm44, %v1232
    %1273 = vst.msk [vmem:[%s1263 + $0x90] sm:$0xff] %vm44, %v1234
    %1274 = vst.msk [vmem:[%s1263 + $0xa0] sm:$0xff] %vm44, %v1236
    %1275 = vst.msk [vmem:[%s1263 + $0xb0] sm:$0xff] %vm44, %v1238
    %1276 = vst.msk [vmem:[%s1263 + $0xc0] sm:$0xff] %vm44, %v1240
    %1277 = vst.msk [vmem:[%s1263 + $0xd0] sm:$0xff] %vm44, %v1242
    %1278 = vst.msk [vmem:[%s1263 + $0xe0] sm:$0xff] %vm44, %v1244
    %1279 = vst.msk [vmem:[%s1263 + $0xf0] sm:$0xff] %vm44, %v1246
    // Predicated region
    $region26: #{tpu_custom_call.1} parent=1 // pred_check
      _
    $region27: #{tpu_custom_call.1} parent=1 // pred_check_branch
      %1281 = sbr.rel (0) target = $region29
    $region28: #{tpu_custom_call.1} parent=1 // pred_region
      %s1283 = ssub.s32 4096, 4096
      %1284 = vsyncadd [#allocation3], %s1283
      %s1285 = sshll.u32 [#allocation2], 4
      %s1286 = int_to_ptr.vmem [resolvable:$true] %s1285
      %1291 = dma.vmem_to_hbm [thread:$0]  %s1286, 4096, %s6, [#allocation3], 128, 128, 8
    $region29: #{tpu_custom_call.1} parent=1 // pred_fallthru
      _
    // Predicated region
    $region30: #{tpu_custom_call.1} parent=1 // pred_check
      _
    $region31: #{tpu_custom_call.1} parent=1 // pred_check_branch
      %1293 = sbr.rel (0) target = $region33
    $region32: #{tpu_custom_call.1} parent=1 // pred_region
      %1294 = dma.done [#allocation3], 4096
    $region33: #{tpu_custom_call.1} parent=1 // pred_fallthru
      _
    %1295 = vsyncpa [#allocation3], 1

</llo_original>
